<compile_context>
chip_gen: v7x
topology: tpu7x:2x2x1
jax: 0.10.0
libtpu: 0.0.40
codegen_flags: <defaults>
</compile_context>

<pallas_src>
import functools

import jax
import jax.numpy as jnp
from jax import lax
from jax.experimental import pallas as pl
from jax.experimental.pallas import tpu as pltpu


# ----------------------------------------------------------------------------
# Parameter init (mirrors nn.init.orthogonal_ + zero bias).
# Weights stored in PyTorch layout (out_features, in_features).
# ----------------------------------------------------------------------------
def orthogonal_weight(key, in_features, out_features, gain=1.0,
                      dtype=jnp.float32):
    rows, cols = out_features, in_features
    flat = jax.random.normal(key, (rows, cols), dtype=jnp.float32)
    if rows < cols:
        flat = flat.T
    q, r = jnp.linalg.qr(flat)
    d = jnp.sign(jnp.diagonal(r))       # sign correction (torch convention)
    q = q * d[None, :]
    if rows < cols:
        q = q.T
    return (gain * q).astype(dtype)     # (out, in)


def make_critic_params(key, state_dim, hidden_width, dtype=jnp.float32):
    k1, k2, k3 = jax.random.split(key, 3)
    w3_torch = orthogonal_weight(k3, hidden_width, 1, dtype=dtype)      # (1, H)
    return {
        "w1": orthogonal_weight(k1, state_dim, hidden_width, dtype=dtype),  # (H, S)
        "b1": jnp.zeros((hidden_width, 1), dtype=dtype),
        "w2": orthogonal_weight(k2, hidden_width, hidden_width, dtype=dtype),  # (H, H)
        "b2": jnp.zeros((hidden_width, 1), dtype=dtype),
        "w3": w3_torch.T,                               # (H, 1) column
        "b3": jnp.zeros((1, 1), dtype=dtype),
    }


# ----------------------------------------------------------------------------
# Kernel: full 3-layer MLP forward for one batch tile.
# Shapes inside the kernel (tb = batch_tile):
#   s: (tb, S)  w1: (H, S)  w2: (H, H)  w3: (H, 1)  biases: (H, 1)/(1, 1)
#   intermediates: (H, tb)  out: (1, tb)   (batch on lanes throughout)
# ----------------------------------------------------------------------------
def critic_kernel(s_ref, w1_ref, b1_ref, w2_ref, b2_ref, w3_ref, b3_ref,
                  o_ref, *, use_tanh, act_dtype):
    act = jnp.tanh if use_tanh else (lambda x: jnp.maximum(x, 0))

    s = s_ref[...].astype(w1_ref.dtype)                  # (tb, S), cast in VMEM
    # Layer 1: contract last dims of W1 (H,S) and s (tb,S) -> (H, tb).
    # Folds the batch transpose into the matmul; batch lands on lanes.
    z1 = lax.dot_general(w1_ref[...], s, (((1,), (1,)), ((), ())),
                         preferred_element_type=jnp.float32)
    h1 = act((z1 + b1_ref[...]).astype(act_dtype))       # (H, tb)

    z2 = jnp.dot(w2_ref[...], h1.astype(w2_ref.dtype),
                 preferred_element_type=jnp.float32)
    h2 = act((z2 + b2_ref[...]).astype(act_dtype))       # (H, tb)

    # Head (out_features=1): VPU multiply + sublane reduce in f32; result is
    # lane-dense (1, tb) -> unmasked stores.
    v = jnp.sum(h2.astype(jnp.float32) * w3_ref[...], axis=0,
                keepdims=True) + b3_ref[...]             # (1, tb)
    o_ref[...] = v.astype(o_ref.dtype)


def _elementwise_bf16_ok():
    """v6e / v7x have bf16 VPU+EUP; v5e (and unknown chips) keep f32."""
    try:
        kind = jax.devices()[0].device_kind.lower()
    except Exception:
        return False
    return ("v6" in kind) or ("v7" in kind) or ("7x" in kind)


def critic_forward(s, params, *, use_tanh=True, batch_tile=None,
                   min_pallas_batch=512, mxu_dtype=jnp.bfloat16,
                   act_dtype=None, vmem_limit_bytes=None):
    """s: (B, state_dim) -> v_s: (B, 1)."""
    B, state_dim = s.shape
    hidden = params["w1"].shape[0]

    if B < min_pallas_batch:
        # Tiny batches: launch/layout overhead dominates -> fused XLA MLP.
        return critic_ref(s, params, use_tanh=use_tanh)

    if act_dtype is None:
        act_dtype = jnp.bfloat16 if _elementwise_bf16_ok() else jnp.float32

    LANE = 128
    if batch_tile is not None:
        batch_tile = max(LANE, (batch_tile // LANE) * LANE)
    else:
        # Derive the tile from a target tile count: balanced tiles, pad
        # overshoot < 128 cols per tile, and >= 2 grid steps when B >= 256 so
        # the "parallel" batch axis can shard across v7x's two TensorCores.
        b_lane = pl.cdiv(B, LANE) * LANE
        max_tile = 8192
        n_tiles = pl.cdiv(b_lane, max_tile)
        if b_lane >= 2 * LANE:
            n_tiles = max(n_tiles, 2)
        batch_tile = pl.cdiv(pl.cdiv(b_lane, n_tiles), LANE) * LANE
    grid = (pl.cdiv(B, batch_tile),)

    # Weights: tiny, cast once per call.  Biases / head stay f32.
    w1 = params["w1"].astype(mxu_dtype)
    w2 = params["w2"].astype(mxu_dtype)
    b1 = params["b1"].astype(jnp.float32)
    b2 = params["b2"].astype(jnp.float32)
    w3 = params["w3"].astype(jnp.float32)
    b3 = params["b3"].astype(jnp.float32)

    const_spec = lambda shape: pl.BlockSpec(shape, lambda i: (0, 0))

    # Advisory cost hint (real B; no wrapper transpose/pad traffic anymore).
    flops = 2 * B * (state_dim * hidden + hidden * hidden + hidden)
    transcendentals = 2 * B * hidden if use_tanh else 0
    param_bytes = int(w1.size * w1.dtype.itemsize
                      + w2.size * w2.dtype.itemsize
                      + 4 * (3 * hidden + 1))
    cost = pl.CostEstimate(
        flops=flops,
        transcendentals=transcendentals,
        bytes_accessed=int(s.size * s.dtype.itemsize) + 4 * B + param_bytes,
    )

    cp_kwargs = dict(dimension_semantics=("parallel",))
    if vmem_limit_bytes is not None:
        cp_kwargs["vmem_limit_bytes"] = vmem_limit_bytes

    kernel = functools.partial(critic_kernel, use_tanh=use_tanh,
                               act_dtype=act_dtype)
    out = pl.pallas_call(
        kernel,
        out_shape=jax.ShapeDtypeStruct((1, B), s.dtype),
        grid_spec=pltpu.PrefetchScalarGridSpec(
            num_scalar_prefetch=0,
            grid=grid,
            in_specs=[
                # s in natural layout; last block may be partial (no pad).
                pl.BlockSpec((batch_tile, state_dim), lambda i: (i, 0)),
                const_spec((hidden, state_dim)),   # w1
                const_spec((hidden, 1)),           # b1
                const_spec((hidden, hidden)),      # w2
                const_spec((hidden, 1)),           # b2
                const_spec((hidden, 1)),           # w3 (column)
                const_spec((1, 1)),                # b3
            ],
            out_specs=pl.BlockSpec((1, batch_tile), lambda i: (0, i)),
        ),
        compiler_params=pltpu.CompilerParams(**cp_kwargs),
        cost_estimate=cost,
    )(s, w1, b1, w2, b2, w3, b3)

    return out.reshape(B, 1)                      # (1, B) -> (B, 1), pure reshape


# ----------------------------------------------------------------------------
# Pure-JAX reference (also the tiny-batch fallback path)
# ----------------------------------------------------------------------------
def critic_ref(s, params, use_tanh=True):
    act = jnp.tanh if use_tanh else (lambda x: jnp.maximum(x, 0.0))
    h1 = act(s @ params["w1"].T + params["b1"].T)
    h2 = act(h1 @ params["w2"].T + params["b2"].T)
    return h2 @ params["w3"] + params["b3"]


if __name__ == "__main__":
    # config = {'state_dim': 8, 'hidden_width': 32, 'use_tanh': 1,
    #           'use_orthogonal_init': True}
    state_dim = 8
    hidden_width = 32
    use_tanh = True

    key = jax.random.PRNGKey(0)
    k_params, k_s1, k_s2 = jax.random.split(key, 3)
    params = make_critic_params(k_params, state_dim, hidden_width)

    # bf16 MXU (+ bf16 tanh on v6e/v7x) vs f32 reference -> loose tolerance.
    TOL = dict(atol=1e-1, rtol=1e-2)

    # Case 1: kernel path with auto tile selection (>= 2 grid steps).
    s1 = jax.random.normal(k_s1, (1024, state_dim), dtype=jnp.float32)
    v1 = jax.block_until_ready(critic_forward(s1, params, use_tanh=use_tanh))
    r1 = critic_ref(s1, params, use_tanh=use_tanh)
    assert v1.shape == (1024, 1)
    assert jnp.allclose(v1, r1, **TOL), float(jnp.max(jnp.abs(v1 - r1)))

    # Case 2: ragged batch, explicit small tile -> multi-step grid with a
    # partial trailing block (no wrapper padding).
    s2 = jax.random.normal(k_s2, (300, state_dim), dtype=jnp.float32)
    v2 = jax.block_until_ready(critic_forward(s2, params, use_tanh=use_tanh,
                                              batch_tile=128,
                                              min_pallas_batch=0))
    r2 = critic_ref(s2, params, use_tanh=use_tanh)
    assert v2.shape == (300, 1)
    assert jnp.allclose(v2, r2, **TOL), float(jnp.max(jnp.abs(v2 - r2)))

    # Case 3: tiny batch -> pure-JAX fallback (default min_pallas_batch).
    s3 = s2[:8]
    v3 = jax.block_until_ready(critic_forward(s3, params, use_tanh=use_tanh))
    assert v3.shape == (8, 1)
    assert jnp.allclose(v3, critic_ref(s3, params, use_tanh=use_tanh),
                        atol=1e-5, rtol=1e-5)

    print("KERNEL_OK")
</pallas_src>

<mosaic_0001>
module attributes {stable_mosaic.version = 11 : i64} {
  func.func @critic_kernel(%arg0: i32, %arg1: memref<512x8xf32, #tpu.memory_space<vmem>>, %arg2: memref<32x8xbf16, #tpu.memory_space<vmem>>, %arg3: memref<32x1xf32, #tpu.memory_space<vmem>>, %arg4: memref<32x32xbf16, #tpu.memory_space<vmem>>, %arg5: memref<32x1xf32, #tpu.memory_space<vmem>>, %arg6: memref<32x1xf32, #tpu.memory_space<vmem>>, %arg7: memref<1x1xf32, #tpu.memory_space<vmem>>, %arg8: memref<1x512xf32, #tpu.memory_space<vmem>>) attributes {dimension_semantics = [#tpu.dimension_semantics<parallel>], iteration_bounds = array<i64: 2>, scalar_prefetch = 0 : i64, scratch_operands = 0 : i64, tpu.core_type = #tpu.core_type<tc>, window_params = [{transform_indices = @transform_0, window_bounds = array<i64: 512, 8>}, {pipeline_mode = #tpu.pipeline_mode<synchronous>, transform_indices = @transform_1, window_bounds = array<i64: 32, 8>}, {pipeline_mode = #tpu.pipeline_mode<synchronous>, transform_indices = @transform_2, window_bounds = array<i64: 32, 1>}, {pipeline_mode = #tpu.pipeline_mode<synchronous>, transform_indices = @transform_3, window_bounds = array<i64: 32, 32>}, {pipeline_mode = #tpu.pipeline_mode<synchronous>, transform_indices = @transform_4, window_bounds = array<i64: 32, 1>}, {pipeline_mode = #tpu.pipeline_mode<synchronous>, transform_indices = @transform_5, window_bounds = array<i64: 32, 1>}, {pipeline_mode = #tpu.pipeline_mode<synchronous>, transform_indices = @transform_6, window_bounds = array<i64: 1, 1>}, {transform_indices = @transform_7, window_bounds = array<i64: 1, 512>}]} {
    %c0 = arith.constant 0 : index
    %c0_0 = arith.constant 0 : index
    %0 = vector.load %arg1[%c0, %c0_0] : memref<512x8xf32, #tpu.memory_space<vmem>>, vector<512x8xf32>
    %1 = arith.truncf %0 : vector<512x8xf32> to vector<512x8xbf16>
    %c0_1 = arith.constant 0 : index
    %c0_2 = arith.constant 0 : index
    %2 = vector.load %arg2[%c0_1, %c0_2] : memref<32x8xbf16, #tpu.memory_space<vmem>>, vector<32x8xbf16>
    %cst = arith.constant dense<0.000000e+00> : vector<32x512xf32>
    %3 = tpu.matmul %2, %1, %cst {dimension_numbers = #tpu.dot_dimension_numbers<[1], [1], [0], [0], [0, 0, 1, 0], [], []>} : vector<32x8xbf16>, vector<512x8xbf16>, vector<32x512xf32> -> vector<32x512xf32>
    %c0_3 = arith.constant 0 : index
    %c0_4 = arith.constant 0 : index
    %4 = vector.load %arg3[%c0_3, %c0_4] : memref<32x1xf32, #tpu.memory_space<vmem>>, vector<32x1xf32>
    %5 = vector.broadcast %4 : vector<32x1xf32> to vector<32x512xf32>
    %6 = arith.addf %3, %5 : vector<32x512xf32>
    %7 = math.tanh %6 : vector<32x512xf32>
    %c0_5 = arith.constant 0 : index
    %c0_6 = arith.constant 0 : index
    %8 = vector.load %arg4[%c0_5, %c0_6] : memref<32x32xbf16, #tpu.memory_space<vmem>>, vector<32x32xbf16>
    %9 = arith.truncf %7 : vector<32x512xf32> to vector<32x512xbf16>
    %cst_7 = arith.constant dense<0.000000e+00> : vector<32x512xf32>
    %10 = tpu.matmul %8, %9, %cst_7 {dimension_numbers = #tpu.dot_dimension_numbers<[1], [0], [0], [1], [0, 0, 1, 1], [], []>} : vector<32x32xbf16>, vector<32x512xbf16>, vector<32x512xf32> -> vector<32x512xf32>
    %c0_8 = arith.constant 0 : index
    %c0_9 = arith.constant 0 : index
    %11 = vector.load %arg5[%c0_8, %c0_9] : memref<32x1xf32, #tpu.memory_space<vmem>>, vector<32x1xf32>
    %12 = vector.broadcast %11 : vector<32x1xf32> to vector<32x512xf32>
    %13 = arith.addf %10, %12 : vector<32x512xf32>
    %14 = math.tanh %13 : vector<32x512xf32>
    %c0_10 = arith.constant 0 : index
    %c0_11 = arith.constant 0 : index
    %15 = vector.load %arg6[%c0_10, %c0_11] : memref<32x1xf32, #tpu.memory_space<vmem>>, vector<32x1xf32>
    %16 = vector.broadcast %15 : vector<32x1xf32> to vector<32x512xf32>
    %17 = arith.mulf %14, %16 : vector<32x512xf32>
    %cst_12 = arith.constant dense<0.000000e+00> : vector<512xf32>
    %18 = vector.multi_reduction <add>, %17, %cst_12 [0] : vector<32x512xf32> to vector<512xf32>
    %19 = vector.shape_cast %18 : vector<512xf32> to vector<1x512xf32>
    %c0_13 = arith.constant 0 : index
    %c0_14 = arith.constant 0 : index
    %20 = vector.load %arg7[%c0_13, %c0_14] : memref<1x1xf32, #tpu.memory_space<vmem>>, vector<1x1xf32>
    %21 = vector.broadcast %20 : vector<1x1xf32> to vector<1x512xf32>
    %22 = arith.addf %19, %21 : vector<1x512xf32>
    %c0_15 = arith.constant 0 : index
    %c0_16 = arith.constant 0 : index
    %23 = vector.load %arg8[%c0_15, %c0_16] : memref<1x512xf32, #tpu.memory_space<vmem>>, vector<1x512xf32>
    tpu.vector_store %arg8[%c0_15, %c0_16], %22 {strides = array<i32>} : memref<1x512xf32, #tpu.memory_space<vmem>>, vector<1x512xf32>,
    return
  }
  func.func @transform_0(%arg0: i32) -> (i32, i32) {
    %c0_i32 = arith.constant 0 : i32
    %c0_i32_0 = arith.constant 0 : i32
    return %arg0, %c0_i32 : i32, i32
  }
  func.func @transform_1(%arg0: i32) -> (i32, i32) {
    %c0_i32 = arith.constant 0 : i32
    %c0_i32_0 = arith.constant 0 : i32
    %c0_i32_1 = arith.constant 0 : i32
    return %c0_i32, %c0_i32_0 : i32, i32
  }
  func.func @transform_2(%arg0: i32) -> (i32, i32) {
    %c0_i32 = arith.constant 0 : i32
    %c0_i32_0 = arith.constant 0 : i32
    %c0_i32_1 = arith.constant 0 : i32
    return %c0_i32, %c0_i32_0 : i32, i32
  }
  func.func @transform_3(%arg0: i32) -> (i32, i32) {
    %c0_i32 = arith.constant 0 : i32
    %c0_i32_0 = arith.constant 0 : i32
    %c0_i32_1 = arith.constant 0 : i32
    return %c0_i32, %c0_i32_0 : i32, i32
  }
  func.func @transform_4(%arg0: i32) -> (i32, i32) {
    %c0_i32 = arith.constant 0 : i32
    %c0_i32_0 = arith.constant 0 : i32
    %c0_i32_1 = arith.constant 0 : i32
    return %c0_i32, %c0_i32_0 : i32, i32
  }
  func.func @transform_5(%arg0: i32) -> (i32, i32) {
    %c0_i32 = arith.constant 0 : i32
    %c0_i32_0 = arith.constant 0 : i32
    %c0_i32_1 = arith.constant 0 : i32
    return %c0_i32, %c0_i32_0 : i32, i32
  }
  func.func @transform_6(%arg0: i32) -> (i32, i32) {
    %c0_i32 = arith.constant 0 : i32
    %c0_i32_0 = arith.constant 0 : i32
    %c0_i32_1 = arith.constant 0 : i32
    return %c0_i32, %c0_i32_0 : i32, i32
  }
  func.func @transform_7(%arg0: i32) -> (i32, i32) {
    %c0_i32 = arith.constant 0 : i32
    %c0_i32_0 = arith.constant 0 : i32
    return %c0_i32, %arg0 : i32, i32
  }
}

</mosaic_0001>

<llo_original>
// kernel: tpu_custom_call.1
$region0: #{tpu_custom_call.1}
  #allocation0 [shape = 'u32[]', space=smem, size = 0x4, offset = 0x4, fixed_abs, tag = 'smem constant byte address 0x4 - core index']
  #allocation1 [shape = 'u32[144,128]{1,0:T(1,128)}', space=vmem, size = 0x12000, scoped, tag = 'internal scratch']
  #allocation2 [shape = 'f32[1,1]{1,0:T(1,128)S(1)}', space=vmem, size = 0x200, scoped, tag = 'scoped memory for tpu_custom_call.1']
  %s0 = inlined_call_operand.vmem [shape: f32[1024,8], index: 0, kind: input, shape index: {}]
  %s1 = inlined_call_operand.vmem [shape: bf16[32,8], index: 1, kind: input, shape index: {}]
  %s2 = inlined_call_operand.vmem [shape: f32[32,1], index: 2, kind: input, shape index: {}]
  %s3 = inlined_call_operand.vmem [shape: bf16[32,32], index: 3, kind: input, shape index: {}]
  %s4 = inlined_call_operand.vmem [shape: f32[32,1], index: 4, kind: input, shape index: {}]
  %s5 = inlined_call_operand.vmem [shape: f32[32,1], index: 5, kind: input, shape index: {}]
  %s6 = inlined_call_operand.<no memory space> [shape: f32[1,1], index: 6, kind: input, shape index: {}]
  %s7 = inlined_call_operand.hbm [shape: f32[1,1024], index: 7, kind: output, shape index: {}]
  %s8 = sld [smem:[#allocation0]]
  $region61: #{tpu_custom_call.1} parent=0
    _
  %s10 = ssub.s32 1, %s8
  %s11 = scalar_select 0, %s10, %s8
  %v12 = vstv %s6
  %13 = vst [vmem:[#allocation2] sm:$0x1] %v12
  $region1: #{tpu_custom_call.1} parent=0
    #allocation3 [shape = 'u8[4096]{0}', space=vmem, size = 0x1000, scoped, tag = 'output window, operand 0']
    #allocation4 [shape = 's32[2]{0}', space=sflag, size = 0x8, scoped, tag = 'scoped memory for tpu_custom_call.1']
    %14 = vsyncpa [#allocation4], 0
    %s15 = scalar_lea.sflag [#allocation4], 1
    %16 = vsyncpa %s15, 0
    loop: start=0, step=1, limit=4
    $region2: #{tpu_custom_call.1} parent=1 // loop_pre_header
      _
    $region3: #{tpu_custom_call.1} parent=1 // loop_header
      %s18 = sphi 0, %s22
      %p19 = scmp.ge.s32.totalorder %s18, 4
      %s28 = sphi 0, %s30
      %s31 = sphi 0, %s28
      %s32 = sphi 0, %s31
      %s48 = sphi 0, %s32
      %s52 = sphi 0, %s52
      %s54 = sphi 0, %s52
      %s55 = sphi 0, %s54
      %s69 = sphi 0, %s55
      %s73 = sphi 0, %s73
      %s75 = sphi 0, %s73
      %s76 = sphi 0, %s75
      %s90 = sphi 0, %s76
      %s94 = sphi 0, %s94
      %s96 = sphi 0, %s94
      %s97 = sphi 0, %s96
      %s111 = sphi 0, %s97
      %s115 = sphi 0, %s115
      %s117 = sphi 0, %s115
      %s118 = sphi 0, %s117
      %s132 = sphi 0, %s118
      %s136 = sphi 0, %s136
      %s138 = sphi 0, %s136
      %s139 = sphi 0, %s138
      %s153 = sphi 0, %s139
      %s157 = sphi 0, %s157
      %s159 = sphi 0, %s157
      %s160 = sphi 0, %s159
      %s174 = sphi 0, %s160
      %s180 = sphi 0, %s182
      %s183 = sphi 0, %s180
      %s184 = sphi 0, %s183
      %s200 = sphi 0, %s184
    $region4: #{tpu_custom_call.1} parent=1 // loop_header_branch
      %21 = sbr.rel (%p19) target = $region8
    $region5: #{tpu_custom_call.1} parent=1 // loop_body
      %s23 = ssub.s32 %s18, 1
      %s24 = ssub.s32 %s18, 2
      %s25 = sadd.s32 %s18, 1
      %s26 = ssub.s32 %s18, %s25
      %p27 = scmp.eq.s32.totalorder %s26, 0
      %s29 = sadd.s32 %s28, 1
      %s30 = scalar_select %p27, %s28, %s29
      %p33 = pneg %p27
      %p34 = scmp.eq.s32.totalorder %s18, 1
      %p35 = por %p33, %p34
      %p36 = scmp.ne.s32.totalorder %s28, %s31
      %p37 = scmp.eq.s32.totalorder %s18, 0
      %p38 = por %p36, %p37
      %p39 = scmp.ne.s32.totalorder %s28, %s31
      %p40 = scmp.eq.s32.totalorder %s23, 1
      %p41 = por %p39, %p40
      %p42 = scmp.ne.s32.totalorder %s31, %s32
      %p43 = scmp.eq.s32.totalorder %s23, 0
      %p44 = por %p42, %p43
      %p45 = scmp.ne.s32.totalorder %s31, %s32
      %p46 = scmp.eq.s32.totalorder %s24, 1
      %p47 = por %p45, %p46
      %p49 = scmp.ne.s32.totalorder %s32, %s48
      %p50 = scmp.eq.s32.totalorder %s24, 0
      %p51 = por %p49, %p50
      %s53 = sadd.s32 %s52, 1
      %p56 = scmp.eq.s32.totalorder %s18, 1
      %p57 = scmp.ne.s32.totalorder %s52, %s54
      %p58 = scmp.eq.s32.totalorder %s18, 0
      %p59 = por %p57, %p58
      %p60 = scmp.ne.s32.totalorder %s52, %s54
      %p61 = scmp.eq.s32.totalorder %s23, 1
      %p62 = por %p60, %p61
      %p63 = scmp.ne.s32.totalorder %s54, %s55
      %p64 = scmp.eq.s32.totalorder %s23, 0
      %p65 = por %p63, %p64
      %p66 = scmp.ne.s32.totalorder %s54, %s55
      %p67 = scmp.eq.s32.totalorder %s24, 1
      %p68 = por %p66, %p67
      %p70 = scmp.ne.s32.totalorder %s55, %s69
      %p71 = scmp.eq.s32.totalorder %s24, 0
      %p72 = por %p70, %p71
      %s74 = sadd.s32 %s73, 1
      %p77 = scmp.eq.s32.totalorder %s18, 1
      %p78 = scmp.ne.s32.totalorder %s73, %s75
      %p79 = scmp.eq.s32.totalorder %s18, 0
      %p80 = por %p78, %p79
      %p81 = scmp.ne.s32.totalorder %s73, %s75
      %p82 = scmp.eq.s32.totalorder %s23, 1
      %p83 = por %p81, %p82
      %p84 = scmp.ne.s32.totalorder %s75, %s76
      %p85 = scmp.eq.s32.totalorder %s23, 0
      %p86 = por %p84, %p85
      %p87 = scmp.ne.s32.totalorder %s75, %s76
      %p88 = scmp.eq.s32.totalorder %s24, 1
      %p89 = por %p87, %p88
      %p91 = scmp.ne.s32.totalorder %s76, %s90
      %p92 = scmp.eq.s32.totalorder %s24, 0
      %p93 = por %p91, %p92
      %s95 = sadd.s32 %s94, 1
      %p98 = scmp.eq.s32.totalorder %s18, 1
      %p99 = scmp.ne.s32.totalorder %s94, %s96
      %p100 = scmp.eq.s32.totalorder %s18, 0
      %p101 = por %p99, %p100
      %p102 = scmp.ne.s32.totalorder %s94, %s96
      %p103 = scmp.eq.s32.totalorder %s23, 1
      %p104 = por %p102, %p103
      %p105 = scmp.ne.s32.totalorder %s96, %s97
      %p106 = scmp.eq.s32.totalorder %s23, 0
      %p107 = por %p105, %p106
      %p108 = scmp.ne.s32.totalorder %s96, %s97
      %p109 = scmp.eq.s32.totalorder %s24, 1
      %p110 = por %p108, %p109
      %p112 = scmp.ne.s32.totalorder %s97, %s111
      %p113 = scmp.eq.s32.totalorder %s24, 0
      %p114 = por %p112, %p113
      %s116 = sadd.s32 %s115, 1
      %p119 = scmp.eq.s32.totalorder %s18, 1
      %p120 = scmp.ne.s32.totalorder %s115, %s117
      %p121 = scmp.eq.s32.totalorder %s18, 0
      %p122 = por %p120, %p121
      %p123 = scmp.ne.s32.totalorder %s115, %s117
      %p124 = scmp.eq.s32.totalorder %s23, 1
      %p125 = por %p123, %p124
      %p126 = scmp.ne.s32.totalorder %s117, %s118
      %p127 = scmp.eq.s32.totalorder %s23, 0
      %p128 = por %p126, %p127
      %p129 = scmp.ne.s32.totalorder %s117, %s118
      %p130 = scmp.eq.s32.totalorder %s24, 1
      %p131 = por %p129, %p130
      %p133 = scmp.ne.s32.totalorder %s118, %s132
      %p134 = scmp.eq.s32.totalorder %s24, 0
      %p135 = por %p133, %p134
      %s137 = sadd.s32 %s136, 1
      %p140 = scmp.eq.s32.totalorder %s18, 1
      %p141 = scmp.ne.s32.totalorder %s136, %s138
      %p142 = scmp.eq.s32.totalorder %s18, 0
      %p143 = por %p141, %p142
      %p144 = scmp.ne.s32.totalorder %s136, %s138
      %p145 = scmp.eq.s32.totalorder %s23, 1
      %p146 = por %p144, %p145
      %p147 = scmp.ne.s32.totalorder %s138, %s139
      %p148 = scmp.eq.s32.totalorder %s23, 0
      %p149 = por %p147, %p148
      %p150 = scmp.ne.s32.totalorder %s138, %s139
      %p151 = scmp.eq.s32.totalorder %s24, 1
      %p152 = por %p150, %p151
      %p154 = scmp.ne.s32.totalorder %s139, %s153
      %p155 = scmp.eq.s32.totalorder %s24, 0
      %p156 = por %p154, %p155
      %s158 = sadd.s32 %s157, 1
      %p161 = scmp.eq.s32.totalorder %s18, 1
      %p162 = scmp.ne.s32.totalorder %s157, %s159
      %p163 = scmp.eq.s32.totalorder %s18, 0
      %p164 = por %p162, %p163
      %p165 = scmp.ne.s32.totalorder %s157, %s159
      %p166 = scmp.eq.s32.totalorder %s23, 1
      %p167 = por %p165, %p166
      %p168 = scmp.ne.s32.totalorder %s159, %s160
      %p169 = scmp.eq.s32.totalorder %s23, 0
      %p170 = por %p168, %p169
      %p171 = scmp.ne.s32.totalorder %s159, %s160
      %p172 = scmp.eq.s32.totalorder %s24, 1
      %p173 = por %p171, %p172
      %p175 = scmp.ne.s32.totalorder %s160, %s174
      %p176 = scmp.eq.s32.totalorder %s24, 0
      %p177 = por %p175, %p176
      %s178 = ssub.s32 %s18, %s25
      %p179 = scmp.eq.s32.totalorder %s178, 0
      %s181 = sadd.s32 %s180, 1
      %s182 = scalar_select %p179, %s180, %s181
      %p185 = pneg %p179
      %p186 = scmp.eq.s32.totalorder %s18, 1
      %p187 = por %p185, %p186
      %p188 = scmp.ne.s32.totalorder %s180, %s183
      %p189 = scmp.eq.s32.totalorder %s18, 0
      %p190 = por %p188, %p189
      %p191 = scmp.ne.s32.totalorder %s180, %s183
      %p192 = scmp.eq.s32.totalorder %s23, 1
      %p193 = por %p191, %p192
      %p194 = scmp.ne.s32.totalorder %s183, %s184
      %p195 = scmp.eq.s32.totalorder %s23, 0
      %p196 = por %p194, %p195
      %p197 = scmp.ne.s32.totalorder %s183, %s184
      %p198 = scmp.eq.s32.totalorder %s24, 1
      %p199 = por %p197, %p198
      %p201 = scmp.ne.s32.totalorder %s184, %s200
      %p202 = scmp.eq.s32.totalorder %s24, 0
      %p203 = por %p201, %p202
      %p204 = scmp.le.s32.totalorder 1, %s18
      %p205 = scmp.lt.s32.totalorder %s18, 3
      %p206 = pnand %p204, %p205
      %p207 = pneg %p206
      // Predicated region
      $region9: #{tpu_custom_call.1} parent=5 // pred_check
        _
      $region10: #{tpu_custom_call.1} parent=5 // pred_check_branch
        %209 = sbr.rel (%p206) target = $region12
      $region11: #{tpu_custom_call.1} parent=5 // pred_region
        %s210 = ssub.s32 %s18, 1
        // Predicated region
        $region13: #{tpu_custom_call.1} parent=11 // pred_check
          %p211 = pneg %p65
        $region14: #{tpu_custom_call.1} parent=11 // pred_check_branch
          %213 = sbr.rel (%p211) target = $region16
        $region15: #{tpu_custom_call.1} parent=11 // pred_region
          _
        $region16: #{tpu_custom_call.1} parent=11 // pred_fallthru
          _
        // Predicated region
        $region17: #{tpu_custom_call.1} parent=11 // pred_check
          %p214 = pneg %p86
        $region18: #{tpu_custom_call.1} parent=11 // pred_check_branch
          %216 = sbr.rel (%p214) target = $region20
        $region19: #{tpu_custom_call.1} parent=11 // pred_region
          _
        $region20: #{tpu_custom_call.1} parent=11 // pred_fallthru
          _
        // Predicated region
        $region21: #{tpu_custom_call.1} parent=11 // pred_check
          %p217 = pneg %p107
        $region22: #{tpu_custom_call.1} parent=11 // pred_check_branch
          %219 = sbr.rel (%p217) target = $region24
        $region23: #{tpu_custom_call.1} parent=11 // pred_region
          _
        $region24: #{tpu_custom_call.1} parent=11 // pred_fallthru
          _
        // Predicated region
        $region25: #{tpu_custom_call.1} parent=11 // pred_check
          %p220 = pneg %p128
        $region26: #{tpu_custom_call.1} parent=11 // pred_check_branch
          %222 = sbr.rel (%p220) target = $region28
        $region27: #{tpu_custom_call.1} parent=11 // pred_region
          _
        $region28: #{tpu_custom_call.1} parent=11 // pred_fallthru
          _
        // Predicated region
        $region29: #{tpu_custom_call.1} parent=11 // pred_check
          %p223 = pneg %p149
        $region30: #{tpu_custom_call.1} parent=11 // pred_check_branch
          %225 = sbr.rel (%p223) target = $region32
        $region31: #{tpu_custom_call.1} parent=11 // pred_region
          _
        $region32: #{tpu_custom_call.1} parent=11 // pred_fallthru
          _
        // Predicated region
        $region33: #{tpu_custom_call.1} parent=11 // pred_check
          %p226 = pneg %p170
        $region34: #{tpu_custom_call.1} parent=11 // pred_check_branch
          %228 = sbr.rel (%p226) target = $region36
        $region35: #{tpu_custom_call.1} parent=11 // pred_region
          _
        $region36: #{tpu_custom_call.1} parent=11 // pred_fallthru
          _
      $region12: #{tpu_custom_call.1} parent=5 // pred_fallthru
        _
      %p229 = scmp.lt.s32.totalorder %s18, 2
      // Predicated region
      $region37: #{tpu_custom_call.1} parent=5 // pred_check
        %p230 = pneg %p229
      $region38: #{tpu_custom_call.1} parent=5 // pred_check_branch
        %232 = sbr.rel (%p230) target = $region40
      $region39: #{tpu_custom_call.1} parent=5 // pred_region
        // Predicated region
        $region41: #{tpu_custom_call.1} parent=39 // pred_check
          %p233 = pneg %p38
        $region42: #{tpu_custom_call.1} parent=39 // pred_check_branch
          %235 = sbr.rel (%p233) target = $region44
        $region43: #{tpu_custom_call.1} parent=39 // pred_region
          %s236 = smul.u32 64, %s18
          %p237 = scmp.lt.s32.totalorder %s236, 127
          %s238 = scalar_select %p237, %s236, 127
          %s239 = smul.addr %s238, 8
          %s240 = scalar_lea.vmem %s0, %s239
          %s241 = smul.u32 64, %s18
        $region44: #{tpu_custom_call.1} parent=39 // pred_fallthru
          _
      $region40: #{tpu_custom_call.1} parent=5 // pred_fallthru
        _
      %p242 = scmp.le.s32.totalorder 1, %s18
      %p243 = scmp.lt.s32.totalorder %s18, 3
      %p244 = pnand %p242, %p243
      %p245 = pneg %p244
      // Predicated region
      $region45: #{tpu_custom_call.1} parent=5 // pred_check
        _
      $region46: #{tpu_custom_call.1} parent=5 // pred_check_branch
        %247 = sbr.rel (%p244) target = $region48
      $region47: #{tpu_custom_call.1} parent=5 // pred_region
        %s248 = ssub.s32 %s18, 1
        %s249 = smul.u32 64, %s23
        %p250 = scmp.lt.s32.totalorder %s249, 127
        %s251 = scalar_select %p250, %s249, 127
        %s252 = smul.addr %s251, 8
        %s253 = scalar_lea.vmem %s0, %s252
        %p254 = pneg %p44
        %p255 = pneg %p41
        %p256 = pneg %p65
        %p257 = pneg %p62
        %p258 = pneg %p86
        %p259 = pneg %p83
        %p260 = pneg %p107
        %p261 = pneg %p104
        %p262 = pneg %p128
        %p263 = pneg %p125
        %p264 = pneg %p149
        %p265 = pneg %p146
        %p266 = pneg %p170
        %p267 = pneg %p167
        %p268 = pneg %p196
        %p269 = pneg %p193
        %s270 = sand.u32 %s183, 1
        %s271 = scalar_lea.sflag [#allocation4], %s270
        %s272 = sand.u32 %s183, 1
        %s273 = smul.addr %s272, 4
        %s274 = scalar_lea.vmem [#allocation3], %s273
        %s275 = smul.u32 64, %s23
        %p276 = scmp.lt.s32.totalorder %s275, 127
        %s277 = scalar_select %p276, %s275, 127
        %s278 = smul.addr %s277, 8
        %s279 = scalar_lea.vmem %s0, %s278
        %s280 = smul.u32 64, %s23
        %s281 = smul.u32 4, %s23
        %v283 = vld [vmem:[%s279] sm:$0xff]
        %v284 = vld [vmem:[%s279 + $0x8] sm:$0xff]
        %v285 = vld [vmem:[%s279 + $0x10] sm:$0xff]
        %v286 = vld [vmem:[%s279 + $0x18] sm:$0xff]
        %v287 = vld [vmem:[%s279 + $0x20] sm:$0xff]
        %v288 = vld [vmem:[%s279 + $0x28] sm:$0xff]
        %v289 = vld [vmem:[%s279 + $0x30] sm:$0xff]
        %v290 = vld [vmem:[%s279 + $0x38] sm:$0xff]
        %v291 = vld [vmem:[%s279 + $0x40] sm:$0xff]
        %v292 = vld [vmem:[%s279 + $0x48] sm:$0xff]
        %v293 = vld [vmem:[%s279 + $0x50] sm:$0xff]
        %v294 = vld [vmem:[%s279 + $0x58] sm:$0xff]
        %v295 = vld [vmem:[%s279 + $0x60] sm:$0xff]
        %v296 = vld [vmem:[%s279 + $0x68] sm:$0xff]
        %v297 = vld [vmem:[%s279 + $0x70] sm:$0xff]
        %v298 = vld [vmem:[%s279 + $0x78] sm:$0xff]
        %v299 = vld [vmem:[%s279 + $0x80] sm:$0xff]
        %v300 = vld [vmem:[%s279 + $0x88] sm:$0xff]
        %v301 = vld [vmem:[%s279 + $0x90] sm:$0xff]
        %v302 = vld [vmem:[%s279 + $0x98] sm:$0xff]
        %v303 = vld [vmem:[%s279 + $0xa0] sm:$0xff]
        %v304 = vld [vmem:[%s279 + $0xa8] sm:$0xff]
        %v305 = vld [vmem:[%s279 + $0xb0] sm:$0xff]
        %v306 = vld [vmem:[%s279 + $0xb8] sm:$0xff]
        %v307 = vld [vmem:[%s279 + $0xc0] sm:$0xff]
        %v308 = vld [vmem:[%s279 + $0xc8] sm:$0xff]
        %v309 = vld [vmem:[%s279 + $0xd0] sm:$0xff]
        %v310 = vld [vmem:[%s279 + $0xd8] sm:$0xff]
        %v311 = vld [vmem:[%s279 + $0xe0] sm:$0xff]
        %v312 = vld [vmem:[%s279 + $0xe8] sm:$0xff]
        %v313 = vld [vmem:[%s279 + $0xf0] sm:$0xff]
        %v314 = vld [vmem:[%s279 + $0xf8] sm:$0xff]
        %v315 = vld [vmem:[%s279 + $0x100] sm:$0xff]
        %v316 = vld [vmem:[%s279 + $0x108] sm:$0xff]
        %v317 = vld [vmem:[%s279 + $0x110] sm:$0xff]
        %v318 = vld [vmem:[%s279 + $0x118] sm:$0xff]
        %v319 = vld [vmem:[%s279 + $0x120] sm:$0xff]
        %v320 = vld [vmem:[%s279 + $0x128] sm:$0xff]
        %v321 = vld [vmem:[%s279 + $0x130] sm:$0xff]
        %v322 = vld [vmem:[%s279 + $0x138] sm:$0xff]
        %v323 = vld [vmem:[%s279 + $0x140] sm:$0xff]
        %v324 = vld [vmem:[%s279 + $0x148] sm:$0xff]
        %v325 = vld [vmem:[%s279 + $0x150] sm:$0xff]
        %v326 = vld [vmem:[%s279 + $0x158] sm:$0xff]
        %v327 = vld [vmem:[%s279 + $0x160] sm:$0xff]
        %v328 = vld [vmem:[%s279 + $0x168] sm:$0xff]
        %v329 = vld [vmem:[%s279 + $0x170] sm:$0xff]
        %v330 = vld [vmem:[%s279 + $0x178] sm:$0xff]
        %v331 = vld [vmem:[%s279 + $0x180] sm:$0xff]
        %v332 = vld [vmem:[%s279 + $0x188] sm:$0xff]
        %v333 = vld [vmem:[%s279 + $0x190] sm:$0xff]
        %v334 = vld [vmem:[%s279 + $0x198] sm:$0xff]
        %v335 = vld [vmem:[%s279 + $0x1a0] sm:$0xff]
        %v336 = vld [vmem:[%s279 + $0x1a8] sm:$0xff]
        %v337 = vld [vmem:[%s279 + $0x1b0] sm:$0xff]
        %v338 = vld [vmem:[%s279 + $0x1b8] sm:$0xff]
        %v339 = vld [vmem:[%s279 + $0x1c0] sm:$0xff]
        %v340 = vld [vmem:[%s279 + $0x1c8] sm:$0xff]
        %v341 = vld [vmem:[%s279 + $0x1d0] sm:$0xff]
        %v342 = vld [vmem:[%s279 + $0x1d8] sm:$0xff]
        %v343 = vld [vmem:[%s279 + $0x1e0] sm:$0xff]
        %v344 = vld [vmem:[%s279 + $0x1e8] sm:$0xff]
        %v345 = vld [vmem:[%s279 + $0x1f0] sm:$0xff]
        %v346 = vld [vmem:[%s279 + $0x1f8] sm:$0xff]
        %v347 = vpack.c.bf16 %v284, %v283
        %v348 = vpack.c.bf16 %v286, %v285
        %v349 = vpack.c.bf16 %v288, %v287
        %v350 = vpack.c.bf16 %v290, %v289
        %v351 = vpack.c.bf16 %v292, %v291
        %v352 = vpack.c.bf16 %v294, %v293
        %v353 = vpack.c.bf16 %v296, %v295
        %v354 = vpack.c.bf16 %v298, %v297
        %v355 = vpack.c.bf16 %v300, %v299
        %v356 = vpack.c.bf16 %v302, %v301
        %v357 = vpack.c.bf16 %v304, %v303
        %v358 = vpack.c.bf16 %v306, %v305
        %v359 = vpack.c.bf16 %v308, %v307
        %v360 = vpack.c.bf16 %v310, %v309
        %v361 = vpack.c.bf16 %v312, %v311
        %v362 = vpack.c.bf16 %v314, %v313
        %v363 = vpack.c.bf16 %v316, %v315
        %v364 = vpack.c.bf16 %v318, %v317
        %v365 = vpack.c.bf16 %v320, %v319
        %v366 = vpack.c.bf16 %v322, %v321
        %v367 = vpack.c.bf16 %v324, %v323
        %v368 = vpack.c.bf16 %v326, %v325
        %v369 = vpack.c.bf16 %v328, %v327
        %v370 = vpack.c.bf16 %v330, %v329
        %v371 = vpack.c.bf16 %v332, %v331
        %v372 = vpack.c.bf16 %v334, %v333
        %v373 = vpack.c.bf16 %v336, %v335
        %v374 = vpack.c.bf16 %v338, %v337
        %v375 = vpack.c.bf16 %v340, %v339
        %v376 = vpack.c.bf16 %v342, %v341
        %v377 = vpack.c.bf16 %v344, %v343
        %v378 = vpack.c.bf16 %v346, %v345
        %v379 = vld [vmem:[%s1] sm:$0xf]
        %v380 = vld [vmem:[%s1 + $0x4] sm:$0xf]
        %v381 = vld [vmem:[%s1 + $0x8] sm:$0xf]
        %v382 = vld [vmem:[%s1 + $0xc] sm:$0xf]
        %v383 = vld [vmem:[%s2] sm:$0xff]
        %v384 = vld [vmem:[%s2 + $0x8] sm:$0xff]
        %v385 = vld [vmem:[%s2 + $0x10] sm:$0xff]
        %v386 = vld [vmem:[%s2 + $0x18] sm:$0xff]
        %388 = vset.pattern.permute.xlu0 0
        %389 = vperm.xlu0 %388, %v383
        %v390 = vpop.permute.xlu0 %389
        %393 = vset.pattern.permute.xlu0 0
        %394 = vperm.xlu0 %393, %v384
        %v395 = vpop.permute.xlu0 %394
        %398 = vset.pattern.permute.xlu0 0
        %399 = vperm.xlu0 %398, %v385
        %v400 = vpop.permute.xlu0 %399
        %403 = vset.pattern.permute.xlu0 0
        %404 = vperm.xlu0 %403, %v386
        %v405 = vpop.permute.xlu0 %404
        %v411 = vunpack.c.l.b16 %v379
        %v412 = vunpack.c.l.b16 %v380
        %v413 = vunpack.c.l.b16 %v381
        %v414 = vunpack.c.l.b16 %v382
        %v415 = vpack.c.b16 %v412, %v411
        %v416 = vpack.c.b16 %v414, %v413
        %vm417 = vcmask 64512
        %v419 = vsel %vm417, %v415, 0
        %v422 = vsel %vm417, %v416, 0
        %v425 = vsel %vm417, %v347, 0
        %v428 = vsel %vm417, %v348, 0
        %v431 = vsel %vm417, %v349, 0
        %v434 = vsel %vm417, %v350, 0
        %v437 = vsel %vm417, %v351, 0
        %v440 = vsel %vm417, %v352, 0
        %v443 = vsel %vm417, %v353, 0
        %v446 = vsel %vm417, %v354, 0
        %v449 = vsel %vm417, %v355, 0
        %v452 = vsel %vm417, %v356, 0
        %v455 = vsel %vm417, %v357, 0
        %v458 = vsel %vm417, %v358, 0
        %v461 = vsel %vm417, %v359, 0
        %v464 = vsel %vm417, %v360, 0
        %v467 = vsel %vm417, %v361, 0
        %v470 = vsel %vm417, %v362, 0
        %v473 = vsel %vm417, %v363, 0
        %v476 = vsel %vm417, %v364, 0
        %v479 = vsel %vm417, %v365, 0
        %v482 = vsel %vm417, %v366, 0
        %v485 = vsel %vm417, %v367, 0
        %v488 = vsel %vm417, %v368, 0
        %v491 = vsel %vm417, %v369, 0
        %v494 = vsel %vm417, %v370, 0
        %v497 = vsel %vm417, %v371, 0
        %v500 = vsel %vm417, %v372, 0
        %v503 = vsel %vm417, %v373, 0
        %v506 = vsel %vm417, %v374, 0
        %v509 = vsel %vm417, %v375, 0
        %v512 = vsel %vm417, %v376, 0
        %v515 = vsel %vm417, %v377, 0
        %v518 = vsel %vm417, %v378, 0
        %520 = vmatprep.subr.bf16.mxu0 0
        %521 = vmatpush1.bf16.xpose.msra.mxu0 %v425
        %522 = vmatprep.subr.bf16.mxu0 0
        %523 = vmatpush1.bf16.xpose.msra.mxu0 %v428
        %524 = vmatprep.subr.bf16.mxu0 0
        %525 = vmatpush1.bf16.xpose.msra.mxu0 %v431
        %526 = vmatprep.subr.bf16.mxu0 0
        %527 = vmatpush1.bf16.xpose.msra.mxu0 %v434
        %528 = vmatprep.subr.bf16.mxu0 0
        %529 = vmatpush1.bf16.xpose.msra.mxu0 %v437
        %530 = vmatprep.subr.bf16.mxu0 0
        %531 = vmatpush1.bf16.xpose.msra.mxu0 %v440
        %532 = vmatprep.subr.bf16.mxu0 0
        %533 = vmatpush1.bf16.xpose.msra.mxu0 %v443
        %534 = vmatprep.subr.bf16.mxu0 0
        %535 = vmatpush1.bf16.xpose.msra.mxu0 %v446
        %536 = vmatprep.subr.bf16.mxu0 0
        %537 = vmatpush1.bf16.xpose.msra.mxu0 %v449
        %538 = vmatprep.subr.bf16.mxu0 0
        %539 = vmatpush1.bf16.xpose.msra.mxu0 %v452
        %540 = vmatprep.subr.bf16.mxu0 0
        %541 = vmatpush1.bf16.xpose.msra.mxu0 %v455
        %542 = vmatprep.subr.bf16.mxu0 0
        %543 = vmatpush1.bf16.xpose.msra.mxu0 %v458
        %544 = vmatprep.subr.bf16.mxu0 0
        %545 = vmatpush1.bf16.xpose.msra.mxu0 %v461
        %546 = vmatprep.subr.bf16.mxu0 0
        %547 = vmatpush1.bf16.xpose.msra.mxu0 %v464
        %548 = vmatprep.subr.bf16.mxu0 0
        %549 = vmatpush1.bf16.xpose.msra.mxu0 %v467
        %550 = vmatprep.subr.bf16.mxu0 0
        %551 = vmatpush1.bf16.xpose.msra.mxu0 %v470
        %552 = vmatprep.mubr.bf16.mxu0 0
        %553 = vmatmul.mubr.bf16.gmra.mrb[0].mxu0 %v419
        %v554 = vpop.f32.mrb[0].mxu0
        %v555 = vadd.f32 %v390, %v554
        %v556 = vpop.f32.mrb[0].mxu0
        %v557 = vadd.f32 %v390, %v556
        %v558 = vpop.f32.mrb[0].mxu0
        %v559 = vadd.f32 %v395, %v558
        %v560 = vpop.f32.mrb[0].mxu0
        %v561 = vadd.f32 %v395, %v560
        %562 = vmatprep.mubr.bf16.mxu0 0
        %563 = vmatmul.mubr.bf16.gmra.mrb[0].mxu0 %v422
        %v564 = vpop.f32.mrb[0].mxu0
        %v565 = vadd.f32 %v400, %v564
        %v566 = vpop.f32.mrb[0].mxu0
        %v567 = vadd.f32 %v400, %v566
        %v568 = vpop.f32.mrb[0].mxu0
        %v569 = vadd.f32 %v405, %v568
        %v570 = vpop.f32.mrb[0].mxu0
        %v571 = vadd.f32 %v405, %v570
        %572 = vdwg.mxu0
        %573 = vmatprep.subr.bf16.mxu0 0
        %574 = vmatpush1.bf16.xpose.msra.mxu0 %v473
        %575 = vmatprep.subr.bf16.mxu0 0
        %576 = vmatpush1.bf16.xpose.msra.mxu0 %v476
        %577 = vmatprep.subr.bf16.mxu0 0
        %578 = vmatpush1.bf16.xpose.msra.mxu0 %v479
        %579 = vmatprep.subr.bf16.mxu0 0
        %580 = vmatpush1.bf16.xpose.msra.mxu0 %v482
        %581 = vmatprep.subr.bf16.mxu0 0
        %582 = vmatpush1.bf16.xpose.msra.mxu0 %v485
        %583 = vmatprep.subr.bf16.mxu0 0
        %584 = vmatpush1.bf16.xpose.msra.mxu0 %v488
        %585 = vmatprep.subr.bf16.mxu0 0
        %586 = vmatpush1.bf16.xpose.msra.mxu0 %v491
        %587 = vmatprep.subr.bf16.mxu0 0
        %588 = vmatpush1.bf16.xpose.msra.mxu0 %v494
        %589 = vmatprep.subr.bf16.mxu0 0
        %590 = vmatpush1.bf16.xpose.msra.mxu0 %v497
        %591 = vmatprep.subr.bf16.mxu0 0
        %592 = vmatpush1.bf16.xpose.msra.mxu0 %v500
        %593 = vmatprep.subr.bf16.mxu0 0
        %594 = vmatpush1.bf16.xpose.msra.mxu0 %v503
        %595 = vmatprep.subr.bf16.mxu0 0
        %596 = vmatpush1.bf16.xpose.msra.mxu0 %v506
        %597 = vmatprep.subr.bf16.mxu0 0
        %598 = vmatpush1.bf16.xpose.msra.mxu0 %v509
        %599 = vmatprep.subr.bf16.mxu0 0
        %600 = vmatpush1.bf16.xpose.msra.mxu0 %v512
        %601 = vmatprep.subr.bf16.mxu0 0
        %602 = vmatpush1.bf16.xpose.msra.mxu0 %v515
        %603 = vmatprep.subr.bf16.mxu0 0
        %604 = vmatpush1.bf16.xpose.msra.mxu0 %v518
        %605 = vmatprep.mubr.bf16.mxu0 0
        %606 = vmatmul.mubr.bf16.gmra.mrb[0].mxu0 %v419
        %v607 = vpop.f32.mrb[0].mxu0
        %v608 = vadd.f32 %v390, %v607
        %v609 = vpop.f32.mrb[0].mxu0
        %v610 = vadd.f32 %v390, %v609
        %v611 = vpop.f32.mrb[0].mxu0
        %v612 = vadd.f32 %v395, %v611
        %v613 = vpop.f32.mrb[0].mxu0
        %v614 = vadd.f32 %v395, %v613
        %615 = vmatprep.mubr.bf16.mxu0 0
        %616 = vmatmul.mubr.bf16.gmra.mrb[0].mxu0 %v422
        %v617 = vpop.f32.mrb[0].mxu0
        %v618 = vadd.f32 %v400, %v617
        %v619 = vpop.f32.mrb[0].mxu0
        %v620 = vadd.f32 %v400, %v619
        %v621 = vpop.f32.mrb[0].mxu0
        %v622 = vadd.f32 %v405, %v621
        %v623 = vpop.f32.mrb[0].mxu0
        %v624 = vadd.f32 %v405, %v623
        %625 = vdwg.mxu0
        %v626 = vtanh.pop %v555
        %v627 = vtanh.pop %v557
        %v628 = vtanh.pop %v608
        %v629 = vtanh.pop %v610
        %v630 = vtanh.pop %v559
        %v631 = vtanh.pop %v561
        %v632 = vtanh.pop %v612
        %v633 = vtanh.pop %v614
        %v634 = vtanh.pop %v565
        %v635 = vtanh.pop %v567
        %v636 = vtanh.pop %v618
        %v637 = vtanh.pop %v620
        %v638 = vtanh.pop %v569
        %v639 = vtanh.pop %v571
        %v640 = vtanh.pop %v622
        %v641 = vtanh.pop %v624
        %v642 = vld [vmem:[%s3] sm:$0xf]
        %v643 = vld [vmem:[%s3 + $0x4] sm:$0xf]
        %v644 = vld [vmem:[%s3 + $0x8] sm:$0xf]
        %v645 = vld [vmem:[%s3 + $0xc] sm:$0xf]
        %v646 = vpack.c.bf16 %v630, %v626
        %v647 = vpack.c.bf16 %v631, %v627
        %v648 = vpack.c.bf16 %v632, %v628
        %v649 = vpack.c.bf16 %v633, %v629
        %v650 = vpack.c.bf16 %v638, %v634
        %v651 = vpack.c.bf16 %v639, %v635
        %v652 = vpack.c.bf16 %v640, %v636
        %v653 = vpack.c.bf16 %v641, %v637
        %v654 = vld [vmem:[%s4] sm:$0xff]
        %v655 = vld [vmem:[%s4 + $0x8] sm:$0xff]
        %v656 = vld [vmem:[%s4 + $0x10] sm:$0xff]
        %v657 = vld [vmem:[%s4 + $0x18] sm:$0xff]
        %659 = vset.pattern.permute.xlu0 0
        %660 = vperm.xlu0 %659, %v654
        %v661 = vpop.permute.xlu0 %660
        %664 = vset.pattern.permute.xlu0 0
        %665 = vperm.xlu0 %664, %v655
        %v666 = vpop.permute.xlu0 %665
        %669 = vset.pattern.permute.xlu0 0
        %670 = vperm.xlu0 %669, %v656
        %v671 = vpop.permute.xlu0 %670
        %674 = vset.pattern.permute.xlu0 0
        %675 = vperm.xlu0 %674, %v657
        %v676 = vpop.permute.xlu0 %675
        %v682 = vunpack.c.l.b16 %v642
        %v683 = vunpack.c.l.b16 %v643
        %v684 = vunpack.c.l.b16 %v644
        %v685 = vunpack.c.l.b16 %v645
        %v686 = vpack.c.b16 %v683, %v682
        %v687 = vpack.c.b16 %v685, %v684
        %vm688 = vcmask 261120
        %v690 = vsel %vm688, %v686, 0
        %v693 = vsel %vm688, %v687, 0
        %695 = vmatprep.subr.bf16.mxu0 %v647
        %696 = vmatpush1.bf16.msra.mxu0 %v646
        %697 = vmatprep.subr.bf16.mxu0 %v651
        %698 = vmatpush1.bf16.msra.mxu0 %v650
        %699 = vmatprep.subr.bf16.mxu0 0
        %700 = vmatpush1.bf16.msra.mxu0 0
        %701 = vmatprep.subr.bf16.mxu0 0
        %702 = vmatpush1.bf16.msra.mxu0 0
        %703 = vmatprep.subr.bf16.mxu0 0
        %704 = vmatpush1.bf16.msra.mxu0 0
        %705 = vmatprep.subr.bf16.mxu0 0
        %706 = vmatpush1.bf16.msra.mxu0 0
        %707 = vmatprep.subr.bf16.mxu0 0
        %708 = vmatpush1.bf16.msra.mxu0 0
        %709 = vmatprep.subr.bf16.mxu0 0
        %710 = vmatpush1.bf16.msra.mxu0 0
        %711 = vmatprep.subr.bf16.mxu0 0
        %712 = vmatpush1.bf16.msra.mxu0 0
        %713 = vmatprep.subr.bf16.mxu0 0
        %714 = vmatpush1.bf16.msra.mxu0 0
        %715 = vmatprep.subr.bf16.mxu0 0
        %716 = vmatpush1.bf16.msra.mxu0 0
        %717 = vmatprep.subr.bf16.mxu0 0
        %718 = vmatpush1.bf16.msra.mxu0 0
        %719 = vmatprep.subr.bf16.mxu0 0
        %720 = vmatpush1.bf16.msra.mxu0 0
        %721 = vmatprep.subr.bf16.mxu0 0
        %722 = vmatpush1.bf16.msra.mxu0 0
        %723 = vmatprep.subr.bf16.mxu0 0
        %724 = vmatpush1.bf16.msra.mxu0 0
        %725 = vmatprep.subr.bf16.mxu0 0
        %726 = vmatpush1.bf16.msra.mxu0 0
        %727 = vmatprep.mubr.bf16.mxu0 0
        %728 = vmatmul.mubr.bf16.gmra.mrb[0].mxu0 %v690
        %v729 = vpop.f32.mrb[0].mxu0
        %v730 = vadd.f32 %v661, %v729
        %v731 = vpop.f32.mrb[0].mxu0
        %v732 = vadd.f32 %v661, %v731
        %v733 = vpop.f32.mrb[0].mxu0
        %v734 = vadd.f32 %v666, %v733
        %v735 = vpop.f32.mrb[0].mxu0
        %v736 = vadd.f32 %v666, %v735
        %737 = vmatprep.mubr.bf16.mxu0 0
        %738 = vmatmul.mubr.bf16.gmra.mrb[0].mxu0 %v693
        %v739 = vpop.f32.mrb[0].mxu0
        %v740 = vadd.f32 %v671, %v739
        %v741 = vpop.f32.mrb[0].mxu0
        %v742 = vadd.f32 %v671, %v741
        %v743 = vpop.f32.mrb[0].mxu0
        %v744 = vadd.f32 %v676, %v743
        %v745 = vpop.f32.mrb[0].mxu0
        %v746 = vadd.f32 %v676, %v745
        %747 = vdwg.mxu0
        %748 = vmatprep.subr.bf16.mxu0 %v649
        %749 = vmatpush1.bf16.msra.mxu0 %v648
        %750 = vmatprep.subr.bf16.mxu0 %v653
        %751 = vmatpush1.bf16.msra.mxu0 %v652
        %752 = vmatprep.subr.bf16.mxu0 0
        %753 = vmatpush1.bf16.msra.mxu0 0
        %754 = vmatprep.subr.bf16.mxu0 0
        %755 = vmatpush1.bf16.msra.mxu0 0
        %756 = vmatprep.subr.bf16.mxu0 0
        %757 = vmatpush1.bf16.msra.mxu0 0
        %758 = vmatprep.subr.bf16.mxu0 0
        %759 = vmatpush1.bf16.msra.mxu0 0
        %760 = vmatprep.subr.bf16.mxu0 0
        %761 = vmatpush1.bf16.msra.mxu0 0
        %762 = vmatprep.subr.bf16.mxu0 0
        %763 = vmatpush1.bf16.msra.mxu0 0
        %764 = vmatprep.subr.bf16.mxu0 0
        %765 = vmatpush1.bf16.msra.mxu0 0
        %766 = vmatprep.subr.bf16.mxu0 0
        %767 = vmatpush1.bf16.msra.mxu0 0
        %768 = vmatprep.subr.bf16.mxu0 0
        %769 = vmatpush1.bf16.msra.mxu0 0
        %770 = vmatprep.subr.bf16.mxu0 0
        %771 = vmatpush1.bf16.msra.mxu0 0
        %772 = vmatprep.subr.bf16.mxu0 0
        %773 = vmatpush1.bf16.msra.mxu0 0
        %774 = vmatprep.subr.bf16.mxu0 0
        %775 = vmatpush1.bf16.msra.mxu0 0
        %776 = vmatprep.subr.bf16.mxu0 0
        %777 = vmatpush1.bf16.msra.mxu0 0
        %778 = vmatprep.subr.bf16.mxu0 0
        %779 = vmatpush1.bf16.msra.mxu0 0
        %780 = vmatprep.mubr.bf16.mxu0 0
        %781 = vmatmul.mubr.bf16.gmra.mrb[0].mxu0 %v690
        %v782 = vpop.f32.mrb[0].mxu0
        %v783 = vadd.f32 %v661, %v782
        %v784 = vpop.f32.mrb[0].mxu0
        %v785 = vadd.f32 %v661, %v784
        %v786 = vpop.f32.mrb[0].mxu0
        %v787 = vadd.f32 %v666, %v786
        %v788 = vpop.f32.mrb[0].mxu0
        %v789 = vadd.f32 %v666, %v788
        %790 = vmatprep.mubr.bf16.mxu0 0
        %791 = vmatmul.mubr.bf16.gmra.mrb[0].mxu0 %v693
        %v792 = vpop.f32.mrb[0].mxu0
        %v793 = vadd.f32 %v671, %v792
        %v794 = vpop.f32.mrb[0].mxu0
        %v795 = vadd.f32 %v671, %v794
        %v796 = vpop.f32.mrb[0].mxu0
        %v797 = vadd.f32 %v676, %v796
        %v798 = vpop.f32.mrb[0].mxu0
        %v799 = vadd.f32 %v676, %v798
        %800 = vdwg.mxu0
        %v801 = vtanh.pop %v730
        %v802 = vtanh.pop %v732
        %v803 = vtanh.pop %v783
        %v804 = vtanh.pop %v785
        %v805 = vtanh.pop %v734
        %v806 = vtanh.pop %v736
        %v807 = vtanh.pop %v787
        %v808 = vtanh.pop %v789
        %v809 = vtanh.pop %v740
        %v810 = vtanh.pop %v742
        %v811 = vtanh.pop %v793
        %v812 = vtanh.pop %v795
        %v813 = vtanh.pop %v744
        %v814 = vtanh.pop %v746
        %v815 = vtanh.pop %v797
        %v816 = vtanh.pop %v799
        %v817 = vld [vmem:[%s5] sm:$0xff]
        %v818 = vld [vmem:[%s5 + $0x8] sm:$0xff]
        %v819 = vld [vmem:[%s5 + $0x10] sm:$0xff]
        %v820 = vld [vmem:[%s5 + $0x18] sm:$0xff]
        %822 = vset.pattern.permute.xlu0 0
        %823 = vperm.xlu0 %822, %v817
        %v824 = vpop.permute.xlu0 %823
        %827 = vset.pattern.permute.xlu0 0
        %828 = vperm.xlu0 %827, %v818
        %v829 = vpop.permute.xlu0 %828
        %832 = vset.pattern.permute.xlu0 0
        %833 = vperm.xlu0 %832, %v819
        %v834 = vpop.permute.xlu0 %833
        %837 = vset.pattern.permute.xlu0 0
        %838 = vperm.xlu0 %837, %v820
        %v839 = vpop.permute.xlu0 %838
        %v841 = vmul.f32 %v801, %v824
        %v842 = vmul.f32 %v802, %v824
        %v843 = vmul.f32 %v803, %v824
        %v844 = vmul.f32 %v804, %v824
        %v845 = vmul.f32 %v805, %v829
        %v846 = vmul.f32 %v806, %v829
        %v847 = vmul.f32 %v807, %v829
        %v848 = vmul.f32 %v808, %v829
        %v849 = vmul.f32 %v809, %v834
        %v850 = vmul.f32 %v810, %v834
        %v851 = vmul.f32 %v811, %v834
        %v852 = vmul.f32 %v812, %v834
        %v853 = vmul.f32 %v813, %v839
        %v854 = vmul.f32 %v814, %v839
        %v855 = vmul.f32 %v815, %v839
        %v856 = vmul.f32 %v816, %v839
        %v857 = vadd.f32 %v841, %v845
        %v858 = vadd.f32 %v857, %v849
        %v859 = vadd.f32 %v858, %v853
        %v860 = vrot.slane %v859, 4
        %v861 = vadd.f32 %v859, %v860
        %v862 = vrot.slane %v861, 2
        %v863 = vadd.f32 %v861, %v862
        %v864 = vrot.slane %v863, 1
        %v865 = vadd.f32 %v863, %v864
        %v866 = vadd.f32 %v842, %v846
        %v867 = vadd.f32 %v866, %v850
        %v868 = vadd.f32 %v867, %v854
        %v869 = vrot.slane %v868, 4
        %v870 = vadd.f32 %v868, %v869
        %v871 = vrot.slane %v870, 2
        %v872 = vadd.f32 %v870, %v871
        %v873 = vrot.slane %v872, 1
        %v874 = vadd.f32 %v872, %v873
        %v875 = vadd.f32 %v843, %v847
        %v876 = vadd.f32 %v875, %v851
        %v877 = vadd.f32 %v876, %v855
        %v878 = vrot.slane %v877, 4
        %v879 = vadd.f32 %v877, %v878
        %v880 = vrot.slane %v879, 2
        %v881 = vadd.f32 %v879, %v880
        %v882 = vrot.slane %v881, 1
        %v883 = vadd.f32 %v881, %v882
        %v884 = vadd.f32 %v844, %v848
        %v885 = vadd.f32 %v884, %v852
        %v886 = vadd.f32 %v885, %v856
        %v887 = vrot.slane %v886, 4
        %v888 = vadd.f32 %v886, %v887
        %v889 = vrot.slane %v888, 2
        %v890 = vadd.f32 %v888, %v889
        %v891 = vrot.slane %v890, 1
        %v892 = vadd.f32 %v890, %v891
        %v893 = vld [vmem:[#allocation2] sm:$0x1]
        %895 = vset.pattern.permute.xlu0 0
        %896 = vperm.xlu0 %895, %v893
        %v897 = vpop.permute.xlu0 %896
        %v899 = vlaneseq
        %v900 = vshrl.u32 %v899, 7
        %v901 = vsub.s32 0, %v900
        %v902 = vrot.slane %v897, %v901
        %v903 = vadd.f32 %v865, %v902
        %v904 = vadd.f32 %v874, %v902
        %v905 = vadd.f32 %v883, %v902
        %v906 = vadd.f32 %v892, %v902
        %v911 = vcombine.low %v903, %v904
        %v912 = vcombine.low %v905, %v906
        %v914 = vunpack.c.l.s4 1966171168
        %v915 = vunpack.c.0.s8 %v914
        %v916 = vlaneseq
        %v917 = vshrl.u32 %v916, 7
        %v918 = vsub.s32 %v915, %v917
        %v919 = vrot.slane %v911, %v918
        %v921 = vunpack.c.l.s4 1966171168
        %v922 = vunpack.c.0.s8 %v921
        %v923 = vlaneseq
        %v924 = vshrl.u32 %v923, 7
        %v925 = vsub.s32 %v922, %v924
        %v926 = vrot.slane %v912, %v925
        %v927 = vcombine.low %v919, %v926
        %v929 = vunpack.c.l.s4 1966171168
        %v930 = vunpack.c.0.s8 %v929
        %v931 = vlaneseq
        %v932 = vshrl.u32 %v931, 7
        %v933 = vsub.s32 %v930, %v932
        %v934 = vrot.slane %v927, %v933
        %v936 = vlaneseq
        %vm937 = vcmp.ge.s32.totalorder %v936, 0
        %vm938 = vcmp.lt.s32.totalorder %v936, 512
        %vm939 = vmand %vm937, %vm938
        %940 = vst.msk [vmem:[%s274] sm:$0xf] %vm939, %v934
        %s941 = sand.u32 %s183, 1
        %s942 = scalar_lea.sflag [#allocation4], %s941
        %s943 = sand.u32 %s183, 1
        %s944 = smul.addr %s943, 4
        %s945 = scalar_lea.vmem [#allocation3], %s944
        // Predicated region
        $region49: #{tpu_custom_call.1} parent=47 // pred_check
          %p946 = pneg %p193
        $region50: #{tpu_custom_call.1} parent=47 // pred_check_branch
          %948 = sbr.rel (%p946) target = $region52
        $region51: #{tpu_custom_call.1} parent=47 // pred_region
          %s949 = smul.u32 4, %s23
          %s951 = ssub.s32 64, 64
          %952 = vsyncadd %s942, %s951
          %s953 = smul.addr %s949, 16
          %s954 = scalar_lea.hbm %s7, %s953
          %s956 = sshll.u32 %s945, 4
          %s957 = int_to_ptr.vmem [resolvable:$true] %s956
          %959 = dma.vmem_to_hbm [thread:$0]  %s957, 64, %s954, %s942
        $region52: #{tpu_custom_call.1} parent=47 // pred_fallthru
          _
      $region48: #{tpu_custom_call.1} parent=5 // pred_fallthru
        _
      %p960 = scmp.le.s32.totalorder 2, %s18
      // Predicated region
      $region53: #{tpu_custom_call.1} parent=5 // pred_check
        %p961 = pneg %p960
      $region54: #{tpu_custom_call.1} parent=5 // pred_check_branch
        %963 = sbr.rel (%p961) target = $region56
      $region55: #{tpu_custom_call.1} parent=5 // pred_region
        %s964 = ssub.s32 %s18, 2
        // Predicated region
        $region57: #{tpu_custom_call.1} parent=55 // pred_check
          %p965 = pneg %p199
        $region58: #{tpu_custom_call.1} parent=55 // pred_check_branch
          %967 = sbr.rel (%p965) target = $region60
        $region59: #{tpu_custom_call.1} parent=55 // pred_region
          %s968 = sand.u32 %s184, 1
          %s969 = scalar_lea.sflag [#allocation4], %s968
          %s970 = sand.u32 %s184, 1
          %s971 = smul.addr %s970, 4
          %s972 = scalar_lea.vmem [#allocation3], %s971
          %973 = dma.done %s969, 64
        $region60: #{tpu_custom_call.1} parent=55 // pred_fallthru
          _
      $region56: #{tpu_custom_call.1} parent=5 // pred_fallthru
        _
    $region6: #{tpu_custom_call.1} parent=1 // loop_footer
      %s22 = sadd.s32 1, %s18
    $region7: #{tpu_custom_call.1} parent=1 // loop_footer_branch
      %17 = sbr.rel target = $region3
    $region8: #{tpu_custom_call.1} parent=1 // loop_exit
      _
    %974 = vsyncpa [#allocation4], 1
    %s975 = scalar_lea.sflag [#allocation4], 1
    %976 = vsyncpa %s975, 1

</llo_original>
